<compile_context>
chip_gen: v6e
topology: v6e:2x2x1
jax: 0.10.0
libtpu: 0.0.40
codegen_flags: <defaults>
</compile_context>

<pallas_src>
import functools
import numpy as np
import jax
import jax.numpy as jnp
from jax.experimental import pallas as pl
from jax.experimental.pallas import tpu as pltpu

BN_EPS = 1e-5
BN_SCALE = 1.0 / np.sqrt(1.0 + BN_EPS)       # eval-mode BN with default running stats
VMEM_LIMIT = 40 * 1024 * 1024                # <= 40 MiB: safe on v7x (64 MiB/TC)


def _round_up(x, m):
    return -(-x // m) * m


def _choose_tm(m, n=256):
    """Row tile: large tiles amortize grid-step overhead and W refetch (v5e/v6e have
    128 MiB VMEM); cap at 512 rows when N is wide; 16-aligned for bf16 packing."""
    cap = 1024 if n <= 512 else 512
    if m >= cap or m % cap == 0:
        return cap
    if cap == 1024 and (m >= 512 or m % 512 == 0):
        return 512
    return max(16, _round_up(m, 16))


def _choose_tk(k):
    """K tile: prefer multiples of 256 (full MXU contraction passes on v6e/v7x)."""
    if k <= 2048:
        return k
    for cand in (1024, 768, 512, 256, 1152, 896, 640, 384, 128):
        if k % cand == 0:
            return cand
    return k                                  # no divisor -> untiled (VMEM-heavier only)


def _a_spec(shape, index_map, extra_buffering=False):
    """A-side BlockSpec; requests a 3-deep pipeline when K is tiled so the A-tile DMA
    hides behind short per-step matmuls.  Falls back to the default double buffer if
    this JAX version lacks pipeline_mode / pl.Buffered."""
    if extra_buffering and hasattr(pl, "Buffered"):
        try:
            return pl.BlockSpec(shape, index_map, pipeline_mode=pl.Buffered(3))
        except TypeError:
            pass
    return pl.BlockSpec(shape, index_map)


# ----------------------------- Pallas kernels ------------------------------

def _bn_relu_matmul_kernel(a_ref, w_ref, o_ref, acc_ref):
    """out = relu(BN_SCALE * (A @ W)); M tiled (parallel), K reduced (arbitrary)."""
    k = pl.program_id(1)

    @pl.when(k == 0)
    def _():
        acc_ref[...] = jnp.zeros_like(acc_ref)

    acc_ref[...] += jnp.dot(a_ref[...], w_ref[...],
                            preferred_element_type=jnp.float32)

    @pl.when(k == pl.num_programs(1) - 1)
    def _():
        o_ref[...] = jnp.maximum(acc_ref[...] * BN_SCALE, 0.0).astype(o_ref.dtype)


def bn_relu_matmul(a, w, out_dtype=jnp.bfloat16):
    """A:(M,K) @ W:(K,N) in bf16 on the MXU, f32 accumulation, BN+ReLU epilogue."""
    M, K = a.shape
    K2, N = w.shape
    assert K == K2
    a = a.astype(jnp.bfloat16)
    w = w.astype(jnp.bfloat16)
    TM = _choose_tm(M, N)
    M_pad = _round_up(M, TM)
    if M_pad != M:
        a = jnp.pad(a, ((0, M_pad - M), (0, 0)))
    tk = _choose_tk(K)
    nk = K // tk
    out = pl.pallas_call(
        _bn_relu_matmul_kernel,
        out_shape=jax.ShapeDtypeStruct((M_pad, N), out_dtype),
        grid_spec=pltpu.PrefetchScalarGridSpec(
            num_scalar_prefetch=0,
            grid=(M_pad // TM, nk),
            in_specs=[
                _a_spec((TM, tk), lambda i, k: (i, k), extra_buffering=(nk > 1)),
                pl.BlockSpec((tk, N), lambda i, k: (k, 0)),
            ],
            out_specs=pl.BlockSpec((TM, N), lambda i, k: (i, 0)),
            scratch_shapes=[pltpu.VMEM((TM, N), jnp.float32)],
        ),
        compiler_params=pltpu.CompilerParams(
            dimension_semantics=("parallel", "arbitrary"),
            vmem_limit_bytes=VMEM_LIMIT),
    )(a, w)
    return out if M_pad == M else out[:M]


def _aspp_project_kernel(b0_ref, b1_ref, b2_ref, b3_ref, w_ref, pooled_ref,
                         o32_ref, o16_ref, *, hw, tm):
    """ASPP projection: accumulate 4 spatial-branch @ Wproj-slice products, add the
    pooled branch as a per-batch constant, BN + ReLU; emit f32 + bf16 copies."""
    acc = jnp.dot(b0_ref[...], w_ref[0], preferred_element_type=jnp.float32)
    acc += jnp.dot(b1_ref[...], w_ref[1], preferred_element_type=jnp.float32)
    acc += jnp.dot(b2_ref[...], w_ref[2], preferred_element_type=jnp.float32)
    acc += jnp.dot(b3_ref[...], w_ref[3], preferred_element_type=jnp.float32)

    # ASPPPooling branch (already projected to 256 in plain JAX, (B, 256)); rows are
    # batch-major so batch = row // (H*W).  Select-loop over the (small) batch dim.
    row0 = pl.program_id(0) * tm
    batch_idx = (row0 + jax.lax.broadcasted_iota(jnp.int32, (tm, 1), 0)) // hw
    pooled_add = jnp.zeros_like(acc)
    for b in range(pooled_ref.shape[0]):
        pooled_add = jnp.where(batch_idx == b, pooled_ref[pl.ds(b, 1), :], pooled_add)

    y = jnp.maximum((acc + pooled_add) * BN_SCALE, 0.0)
    o32_ref[...] = y
    o16_ref[...] = y.astype(jnp.bfloat16)


def aspp_project(branches, wproj_slices, pooled_proj, hw):
    """branches: 4 x (M,256) bf16; wproj_slices: (4,256,256) bf16; pooled_proj: (B,256)."""
    M = branches[0].shape[0]
    TM = _choose_tm(M, 256)
    M_pad = _round_up(M, TM)
    if M_pad != M:
        branches = [jnp.pad(b, ((0, M_pad - M), (0, 0))) for b in branches]
    kernel = functools.partial(_aspp_project_kernel, hw=hw, tm=TM)
    feat32, feat16 = pl.pallas_call(
        kernel,
        out_shape=(jax.ShapeDtypeStruct((M_pad, 256), jnp.float32),
                   jax.ShapeDtypeStruct((M_pad, 256), jnp.bfloat16)),
        grid_spec=pltpu.PrefetchScalarGridSpec(
            num_scalar_prefetch=0,
            grid=(M_pad // TM,),
            in_specs=[pl.BlockSpec((TM, 256), lambda i: (i, 0)) for _ in range(4)]
                     + [pl.BlockSpec((4, 256, 256), lambda i: (0, 0, 0)),
                        pl.BlockSpec(pooled_proj.shape, lambda i: (0, 0))],
            out_specs=[pl.BlockSpec((TM, 256), lambda i: (i, 0)),
                       pl.BlockSpec((TM, 256), lambda i: (i, 0))],
        ),
        compiler_params=pltpu.CompilerParams(
            dimension_semantics=("parallel",),
            vmem_limit_bytes=VMEM_LIMIT),
    )(*branches, wproj_slices, pooled_proj)
    if M_pad != M:
        feat32, feat16 = feat32[:M], feat16[:M]
    return feat32, feat16


def _head_fused_kernel(a_ref, w1_ref, w2_ref, b2_ref, o_ref, acc_ref, *, ncls, c_pad):
    """Per-class 3x3 head conv (batched along N) + BN + ReLU, fused with the head2
    1x1 conv + bias epilogue (W2/b2 resident in VMEM; no logits HBM round trip)."""
    k = pl.program_id(1)

    @pl.when(k == 0)
    def _():
        acc_ref[...] = jnp.zeros_like(acc_ref)

    acc_ref[...] += jnp.dot(a_ref[...], w1_ref[...],
                            preferred_element_type=jnp.float32)

    @pl.when(k == pl.num_programs(1) - 1)
    def _():
        y = jnp.maximum(acc_ref[...] * BN_SCALE, 0.0).astype(jnp.bfloat16)
        for i in range(ncls):                          # static, per-class 256-slices
            hi = jnp.dot(y[:, i * 256:(i + 1) * 256], w2_ref[i],
                         preferred_element_type=jnp.float32) + b2_ref[i]
            o_ref[:, i * c_pad:(i + 1) * c_pad] = hi   # 128-aligned lane-dense store


def head_fused(a, w1, w2s, b2s, ncls, c_pad):
    """a:(M,9*256) bf16, w1:(9*256,256*ncls) bf16, w2s:(ncls,256,c_pad) bf16,
    b2s:(ncls,1,c_pad) f32 -> (M, ncls*c_pad) f32 head logits (per-class 128-padded)."""
    M, K = a.shape
    N1 = w1.shape[1]
    TM = _choose_tm(M, N1)
    M_pad = _round_up(M, TM)
    if M_pad != M:
        a = jnp.pad(a, ((0, M_pad - M), (0, 0)))
    tk = _choose_tk(K)
    nk = K // tk
    kernel = functools.partial(_head_fused_kernel, ncls=ncls, c_pad=c_pad)
    out = pl.pallas_call(
        kernel,
        out_shape=jax.ShapeDtypeStruct((M_pad, ncls * c_pad), jnp.float32),
        grid_spec=pltpu.PrefetchScalarGridSpec(
            num_scalar_prefetch=0,
            grid=(M_pad // TM, nk),
            in_specs=[
                _a_spec((TM, tk), lambda i, k: (i, k), extra_buffering=(nk > 1)),
                pl.BlockSpec((tk, N1), lambda i, k: (k, 0)),
                pl.BlockSpec((ncls, 256, c_pad), lambda i, k: (0, 0, 0)),
                pl.BlockSpec((ncls, 1, c_pad), lambda i, k: (0, 0, 0)),
            ],
            out_specs=pl.BlockSpec((TM, ncls * c_pad), lambda i, k: (i, 0)),
            scratch_shapes=[pltpu.VMEM((TM, N1), jnp.float32)],
        ),
        compiler_params=pltpu.CompilerParams(
            dimension_semantics=("parallel", "arbitrary"),
            vmem_limit_bytes=VMEM_LIMIT),
    )(a, w1, w2s, b2s)
    return out if M_pad == M else out[:M]


def _prototype_kernel(pmax_ref, feat_ref, o_ref, *, n_prop):
    """Per-proposal masked mean; one-hot mask built in-kernel from the argmax map."""
    pmax = pmax_ref[0]                                       # (1, HWp) int32
    hwp = pmax.shape[-1]
    cls_ids = jax.lax.broadcasted_iota(jnp.int32, (n_prop, hwp), 0)
    mask = (cls_ids == pmax).astype(jnp.bfloat16)            # (Np, HWp), exact 0/1
    feat = feat_ref[0]                                       # (HWp, C) bf16
    sums = jnp.dot(mask, feat, preferred_element_type=jnp.float32)
    counts = jnp.sum(mask.astype(jnp.float32), axis=1, keepdims=True)
    o_ref[0] = jnp.where(counts > 0, sums / jnp.maximum(counts, 1.0),
                         jnp.float32(1e-9))                  # empty proposal -> 1e-9


def prototype_means(pmax, feat, n_prop):
    """pmax: (B,1,HWp) int32 (padded with n_prop), feat: (B,HWp,C) bf16 (zero-padded)."""
    B, _, hwp = pmax.shape
    _, _, C = feat.shape
    kernel = functools.partial(_prototype_kernel, n_prop=n_prop)
    return pl.pallas_call(
        kernel,
        out_shape=jax.ShapeDtypeStruct((B, n_prop, C), jnp.float32),
        grid_spec=pltpu.PrefetchScalarGridSpec(
            num_scalar_prefetch=0,
            grid=(B,),
            in_specs=[pl.BlockSpec((1, 1, hwp), lambda b: (b, 0, 0)),
                      pl.BlockSpec((1, hwp, C), lambda b: (b, 0, 0))],
            out_specs=pl.BlockSpec((1, n_prop, C), lambda b: (b, 0, 0)),
        ),
        compiler_params=pltpu.CompilerParams(dimension_semantics=("parallel",)),
    )(pmax, feat)


def _proposal_head_kernel(pp_ref, w1_ref, w2_ref, w3_ref, wf_ref, b_ref, o_ref):
    """Whole proposal-head chain for ALL classes in one grid-free kernel:
    3x [matmul + BN + ReLU] + final 1x1 + bias, activations stay in VMEM."""
    y = pp_ref[...]
    for w_ref in (w1_ref, w2_ref, w3_ref):
        z = jnp.dot(y, w_ref[...], preferred_element_type=jnp.float32)
        y = jnp.maximum(z * BN_SCALE, 0.0).astype(jnp.bfloat16)
    o_ref[...] = jnp.dot(y, wf_ref[...], preferred_element_type=jnp.float32) + b_ref[...]


def proposal_head_fused(pp, w1cat, w2bd, w3bd, wfbd, bias):
    """pp:(M2p,256) bf16; w1cat:(256,256*ncls); w2bd/w3bd:(256*ncls,256*ncls) block-diag;
    wfbd:(256*ncls, ncls*c_pad) block-diag; bias:(1, ncls*c_pad) f32."""
    M2p = pp.shape[0]
    n_out = wfbd.shape[1]
    return pl.pallas_call(
        _proposal_head_kernel,
        out_shape=jax.ShapeDtypeStruct((M2p, n_out), jnp.float32),
    )(pp, w1cat, w2bd, w3bd, wfbd, bias)


# --------------------------- conv-as-matmul glue ----------------------------

def _im2col_3x3(x, d):
    """x: (B,H,W,C) NHWC -> (B*H*W, 9*C) patches for a 3x3 conv, dilation=padding=d.
    Dtype-preserving: cast to bf16 BEFORE calling to keep the patch matrix in bf16."""
    B, H, W, C = x.shape
    xp = jnp.pad(x, ((0, 0), (d, d), (d, d), (0, 0)))
    cols = [xp[:, ky * d:ky * d + H, kx * d:kx * d + W, :]
            for ky in range(3) for kx in range(3)]
    return jnp.concatenate(cols, axis=-1).reshape(B * H * W, 9 * C)


def nearest_resize(p, out_h, out_w):
    """PyTorch F.interpolate(..., mode='nearest') semantics: src = floor(dst*in/out)."""
    _, _, in_h, in_w = p.shape
    idx_h = jnp.floor(jnp.arange(out_h) * (in_h / out_h)).astype(jnp.int32)
    idx_w = jnp.floor(jnp.arange(out_w) * (in_w / out_w)).astype(jnp.int32)
    return p[:, :, idx_h[:, None], idx_w[None, :]]


# ------------------------------ parameter init ------------------------------

def _kaiming(key, shape):                       # shape = (Cout, Cin, kh, kw)
    fan_in = shape[1] * shape[2] * shape[3]
    return jax.random.normal(key, shape, jnp.float32) * np.sqrt(2.0 / fan_in)


def _bias(key, c_out, fan_in):
    bound = 1.0 / np.sqrt(fan_in)
    return jax.random.uniform(key, (c_out,), jnp.float32, -bound, bound)


def init_params(key, in_channels, num_classes):
    keys = iter(jax.random.split(key, 64))
    p = {}
    p['aspp_c0'] = _kaiming(next(keys), (256, in_channels, 1, 1))
    p['aspp_atrous'] = [_kaiming(next(keys), (256, in_channels, 3, 3)) for _ in range(3)]
    p['aspp_pool'] = _kaiming(next(keys), (256, in_channels, 1, 1))
    p['aspp_proj'] = _kaiming(next(keys), (256, 5 * 256, 1, 1))
    p['head_w'] = [_kaiming(next(keys), (256, 256, 3, 3)) for _ in num_classes]
    p['head2_w'] = [_kaiming(next(keys), (c, 256, 1, 1)) for c in num_classes]
    p['head2_b'] = [_bias(next(keys), c, 256) for c in num_classes]
    p['prop_w'] = [[_kaiming(next(keys), (256, 256, 3, 3)) for _ in range(3)]
                   for _ in num_classes]
    p['prop_final_w'] = [_kaiming(next(keys), (c, 256, 1, 1)) for c in num_classes]
    p['prop_final_b'] = [_bias(next(keys), c, 256) for c in num_classes]
    return p


# -------------------------------- forward -----------------------------------

def aspp_forward(p, x):
    """x: (B,H,W,Cin) NHWC -> (feat_f32 (M,256), feat_bf16 (M,256))."""
    B, H, W, Cin = x.shape
    M = B * H * W
    hw = H * W
    x16 = x.astype(jnp.bfloat16)                 # bf16 BEFORE im2col (halves patch HBM)

    branches = []
    # 1x1 branch.
    w0 = jnp.transpose(p['aspp_c0'][:, :, 0, 0], (1, 0)).astype(jnp.bfloat16)
    branches.append(bn_relu_matmul(x16.reshape(M, Cin), w0))
    # atrous branches (im2col patches in bf16).
    for w3, d in zip(p['aspp_atrous'], (12, 24, 36)):
        a = _im2col_3x3(x16, d)
        wm = jnp.transpose(w3, (2, 3, 1, 0)).reshape(9 * Cin, 256).astype(jnp.bfloat16)
        branches.append(bn_relu_matmul(a, wm))

    # ASPPPooling: GAP + 1x1 conv + BN + ReLU; upsample of a 1x1 map == broadcast.
    # M=B rows -> plain JAX, then folded into the projection kernel as a per-batch add.
    gap = jnp.mean(x, axis=(1, 2))                                   # (B, Cin)
    wp = jnp.transpose(p['aspp_pool'][:, :, 0, 0], (1, 0))
    pooled = jnp.maximum(jnp.dot(gap, wp) * BN_SCALE, 0.0)           # (B, 256)

    # Projection: Wproj (1280,256) split into 5 K-slices; no (M,1280) concat.
    wproj = jnp.transpose(p['aspp_proj'][:, :, 0, 0], (1, 0))        # (1280, 256)
    wproj_sp = jnp.stack([wproj[i * 256:(i + 1) * 256] for i in range(4)]
                         ).astype(jnp.bfloat16)                      # (4,256,256)
    pooled_proj = jnp.dot(pooled, wproj[4 * 256:5 * 256])            # (B, 256) f32, tiny
    # Dropout(0.1) is identity in eval mode.
    return aspp_project(branches, wproj_sp, pooled_proj, hw)


def deeplab_head_forward(params, feature, proposal_flag, proposal, num_classes):
    del proposal_flag                                                # unused by reference
    x = jnp.transpose(feature['out'], (0, 2, 3, 1)).astype(jnp.float32)   # NCHW->NHWC
    B, H, W, _ = x.shape
    M = B * H * W
    hw = H * W
    ncls = len(num_classes)
    csum = sum(num_classes)

    feat32, feat16 = aspp_forward(params, x)                         # (M,256) f32 / bf16
    # FeatureProjection -> identity (ConvexHull undefined -> exception path);
    # FeatureOperation: 0.8*f + 0.2*f == f  -> both are no-ops (no kernels launched).

    # ---- per-class heads: one matmul (classes batched along N) fused with head2 ----
    a_head = _im2col_3x3(feat16.reshape(B, H, W, 256), 1)            # (M, 2304) bf16
    w_head = jnp.concatenate(
        [jnp.transpose(w, (2, 3, 1, 0)).reshape(9 * 256, 256) for w in params['head_w']],
        axis=1).astype(jnp.bfloat16)                                 # (2304, 256*ncls)
    c_pad = _round_up(max(num_classes), 128)
    w2s = jnp.stack([jnp.pad(jnp.transpose(params['head2_w'][i][:, :, 0, 0], (1, 0)),
                             ((0, 0), (0, c_pad - num_classes[i])))
                     for i in range(ncls)]).astype(jnp.bfloat16)     # (ncls,256,c_pad)
    b2s = jnp.stack([jnp.pad(params['head2_b'][i], (0, c_pad - num_classes[i]))[None, :]
                     for i in range(ncls)]).astype(jnp.float32)      # (ncls,1,c_pad)
    heads_pad = head_fused(a_head, w_head, w2s, b2s, ncls, c_pad)    # (M, ncls*c_pad)
    heads = jnp.concatenate([heads_pad[:, i * c_pad:i * c_pad + c]
                             for i, c in enumerate(num_classes)], axis=-1)
    heads_nchw = jnp.transpose(heads.reshape(B, H, W, csum), (0, 3, 1, 2))

    # ---- proposal -> nearest resize -> argmax -> per-proposal prototype means ----
    n_prop = proposal.shape[1]
    prop = nearest_resize(proposal.astype(jnp.float32), H, W)        # (B,Np,H,W)
    prop_max = jnp.argmax(prop, axis=1).astype(jnp.int32)            # (B,H,W)
    hw_pad = _round_up(hw, 128)                                      # lane-dense HW
    pmax_flat = prop_max.reshape(B, 1, hw)
    feat_b = feat16.reshape(B, hw, 256)                              # bf16 feature
    if hw_pad > hw:
        pmax_flat = jnp.pad(pmax_flat, ((0, 0), (0, 0), (0, hw_pad - hw)),
                            constant_values=n_prop)                  # never matches
        feat_b = jnp.pad(feat_b, ((0, 0), (0, hw_pad - hw), (0, 0)))
    pps = prototype_means(pmax_flat, feat_b, n_prop)                 # (B,Np,256) f32

    # ---- proposal head: all classes in ONE grid-free kernel (M2 is tiny) ----
    # NOTE: PPs are 1x1 spatial maps, so the 3x3 convs with padding=1 only ever use
    # their center tap [:, :, 1, 1] (zero surround) -> exact 1x1 matmul equivalence.
    M2 = B * n_prop
    M2p = _round_up(M2, 16)
    pp = pps.reshape(M2, 256).astype(jnp.bfloat16)
    if M2p > M2:
        pp = jnp.pad(pp, ((0, M2p - M2), (0, 0)))
    cp2 = _round_up(max(num_classes), 128)
    w1cat = jnp.concatenate([jnp.transpose(params['prop_w'][i][0][:, :, 1, 1], (1, 0))
                             for i in range(ncls)], axis=1).astype(jnp.bfloat16)

    def _block_diag(mats, out_w):
        bd = jnp.zeros((256 * ncls, out_w * ncls), jnp.float32)
        for i, m in enumerate(mats):
            bd = bd.at[i * 256:(i + 1) * 256, i * out_w:i * out_w + m.shape[1]].set(m)
        return bd.astype(jnp.bfloat16)

    w2bd = _block_diag([jnp.transpose(params['prop_w'][i][1][:, :, 1, 1], (1, 0))
                        for i in range(ncls)], 256)
    w3bd = _block_diag([jnp.transpose(params['prop_w'][i][2][:, :, 1, 1], (1, 0))
                        for i in range(ncls)], 256)
    wfbd = _block_diag([jnp.transpose(params['prop_final_w'][i][:, :, 0, 0], (1, 0))
                        for i in range(ncls)], cp2)
    bf = jnp.concatenate([jnp.pad(params['prop_final_b'][i], (0, cp2 - num_classes[i]))
                          for i in range(ncls)])[None, :].astype(jnp.float32)
    cl_pad = proposal_head_fused(pp, w1cat, w2bd, w3bd, wfbd, bf)    # (M2p, ncls*cp2)
    cl = jnp.concatenate([cl_pad[:M2, i * cp2:i * cp2 + c]
                          for i, c in enumerate(num_classes)], axis=-1)
    cl = cl.reshape(B, n_prop, csum)

    feat_nchw = jnp.transpose(feat32.reshape(B, H, W, 256), (0, 3, 1, 2))
    return cl, heads_nchw, feat_nchw


# ---------------------------------- main -------------------------------------

if __name__ == "__main__":
    key = jax.random.PRNGKey(0)
    k_param, k_feat, k_prop = jax.random.split(key, 3)

    in_channels = 32
    num_classes = [3, 4]
    B, H, W = 2, 8, 8
    n_prop, hp, wp = 8, 4, 4

    params = init_params(k_param, in_channels, num_classes)
    x = jax.random.normal(k_feat, (B, in_channels, H, W), jnp.float32)       # NCHW
    prop_idx = jax.random.randint(k_prop, (B, hp, wp), 0, n_prop)
    proposal = jax.nn.one_hot(prop_idx, n_prop, axis=1, dtype=jnp.float32)   # (B,Np,hp,wp)

    cl, heads, feat = deeplab_head_forward(params, {'out': x}, True, proposal, num_classes)
    jax.block_until_ready((cl, heads, feat))

    assert cl.shape == (B, n_prop, sum(num_classes))
    assert heads.shape == (B, sum(num_classes), H, W)
    assert feat.shape == (B, 256, H, W)
    print("KERNEL_OK")
</pallas_src>

<mosaic_0001>
module attributes {stable_mosaic.version = 11 : i64} {
  func.func @_bn_relu_matmul_kernel(%arg0: i32, %arg1: i32, %arg2: memref<128x32xbf16, #tpu.memory_space<vmem>>, %arg3: memref<32x256xbf16, #tpu.memory_space<vmem>>, %arg4: memref<128x256xbf16, #tpu.memory_space<vmem>>, %arg5: memref<128x256xf32, #tpu.memory_space<vmem>>) attributes {dimension_semantics = [#tpu.dimension_semantics<parallel>, #tpu.dimension_semantics<arbitrary>], iteration_bounds = array<i64: 1, 1>, scalar_prefetch = 0 : i64, scratch_operands = 1 : i64, tpu.core_type = #tpu.core_type<tc>, window_params = [{transform_indices = @transform_0, window_bounds = array<i64: 128, 32>}, {transform_indices = @transform_1, window_bounds = array<i64: 32, 256>}, {transform_indices = @transform_2, window_bounds = array<i64: 128, 256>}]} {
    %c0_i32 = arith.constant 0 : i32
    %0 = arith.cmpi eq, %arg1, %c0_i32 : i32
    %1 = arith.extui %0 : i1 to i32
    %c0_i32_0 = arith.constant 0 : i32
    %2 = arith.cmpi ne, %1, %c0_i32_0 : i32
    scf.if %2 {
      %cst_10 = arith.constant 0.000000e+00 : f32
      %12 = vector.broadcast %cst_10 : f32 to vector<128x256xf32>
      %c0_11 = arith.constant 0 : index
      %c0_12 = arith.constant 0 : index
      %13 = vector.load %arg5[%c0_11, %c0_12] : memref<128x256xf32, #tpu.memory_space<vmem>>, vector<128x256xf32>
      tpu.vector_store %arg5[%c0_11, %c0_12], %12 {strides = array<i32>} : memref<128x256xf32, #tpu.memory_space<vmem>>, vector<128x256xf32>,
    } else {
    }
    %c0 = arith.constant 0 : index
    %c0_1 = arith.constant 0 : index
    %3 = vector.load %arg5[%c0, %c0_1] : memref<128x256xf32, #tpu.memory_space<vmem>>, vector<128x256xf32>
    %c0_2 = arith.constant 0 : index
    %c0_3 = arith.constant 0 : index
    %4 = vector.load %arg2[%c0_2, %c0_3] : memref<128x32xbf16, #tpu.memory_space<vmem>>, vector<128x32xbf16>
    %c0_4 = arith.constant 0 : index
    %c0_5 = arith.constant 0 : index
    %5 = vector.load %arg3[%c0_4, %c0_5] : memref<32x256xbf16, #tpu.memory_space<vmem>>, vector<32x256xbf16>
    %cst = arith.constant dense<0.000000e+00> : vector<128x256xf32>
    %6 = tpu.matmul %4, %5, %cst {dimension_numbers = #tpu.dot_dimension_numbers<[1], [0], [0], [1], [0, 0, 1, 1], [], []>} : vector<128x32xbf16>, vector<32x256xbf16>, vector<128x256xf32> -> vector<128x256xf32>
    %7 = arith.addf %3, %6 : vector<128x256xf32>
    %c0_6 = arith.constant 0 : index
    %c0_7 = arith.constant 0 : index
    %8 = vector.load %arg5[%c0_6, %c0_7] : memref<128x256xf32, #tpu.memory_space<vmem>>, vector<128x256xf32>
    tpu.vector_store %arg5[%c0_6, %c0_7], %7 {strides = array<i32>} : memref<128x256xf32, #tpu.memory_space<vmem>>, vector<128x256xf32>,
    %c0_i32_8 = arith.constant 0 : i32
    %9 = arith.cmpi eq, %arg1, %c0_i32_8 : i32
    %10 = arith.extui %9 : i1 to i32
    %c0_i32_9 = arith.constant 0 : i32
    %11 = arith.cmpi ne, %10, %c0_i32_9 : i32
    scf.if %11 {
      %c0_10 = arith.constant 0 : index
      %c0_11 = arith.constant 0 : index
      %12 = vector.load %arg5[%c0_10, %c0_11] : memref<128x256xf32, #tpu.memory_space<vmem>>, vector<128x256xf32>
      %cst_12 = arith.constant 0.999994993 : f32
      %13 = vector.broadcast %cst_12 : f32 to vector<128x256xf32>
      %14 = arith.mulf %12, %13 : vector<128x256xf32>
      %cst_13 = arith.constant 0.000000e+00 : f32
      %15 = vector.broadcast %cst_13 : f32 to vector<128x256xf32>
      %16 = arith.maximumf %14, %15 : vector<128x256xf32>
      %17 = arith.truncf %16 : vector<128x256xf32> to vector<128x256xbf16>
      %c0_14 = arith.constant 0 : index
      %c0_15 = arith.constant 0 : index
      %18 = vector.load %arg4[%c0_14, %c0_15] : memref<128x256xbf16, #tpu.memory_space<vmem>>, vector<128x256xbf16>
      tpu.vector_store %arg4[%c0_14, %c0_15], %17 {strides = array<i32>} : memref<128x256xbf16, #tpu.memory_space<vmem>>, vector<128x256xbf16>,
    } else {
    }
    return
  }
  func.func @transform_0(%arg0: i32, %arg1: i32) -> (i32, i32) {
    %c0_i32 = arith.constant 0 : i32
    return %arg0, %arg1 : i32, i32
  }
  func.func @transform_1(%arg0: i32, %arg1: i32) -> (i32, i32) {
    %c0_i32 = arith.constant 0 : i32
    %c0_i32_0 = arith.constant 0 : i32
    return %arg1, %c0_i32 : i32, i32
  }
  func.func @transform_2(%arg0: i32, %arg1: i32) -> (i32, i32) {
    %c0_i32 = arith.constant 0 : i32
    %c0_i32_0 = arith.constant 0 : i32
    return %arg0, %c0_i32 : i32, i32
  }
}

</mosaic_0001>

<llo_original>
// kernel: tpu_custom_call.1
$region0: #{tpu_custom_call.1}
  #allocation0 [shape = 'u32[]', space=smem, size = 0x4, offset = 0x4, fixed_abs, tag = 'smem constant byte address 0x4 - core index']
  #allocation1 [shape = 'u32[144,128]{1,0:T(1,128)}', space=vmem, size = 0x12000, scoped, tag = 'internal scratch']
  #allocation2 [shape = 'f32[128,256]{1,0:T(8,128)}', space=vmem, size = 0x20000, scoped, tag = 'scratch operand']
  %s0 = inlined_call_operand.vmem [shape: bf16[128,32], index: 0, kind: input, shape index: {}]
  %s1 = inlined_call_operand.vmem [shape: bf16[32,256], index: 1, kind: input, shape index: {}]
  %s2 = inlined_call_operand.hbm [shape: bf16[128,256], index: 2, kind: output, shape index: {}]
  %s3 = sld [smem:[#allocation0]]
  $region26: #{tpu_custom_call.1} parent=0
    _
  %s5 = ssub.s32 1, %s3
  %s6 = scalar_select 0, %s5, %s3
  $region1: #{tpu_custom_call.1} parent=0
    #allocation3 [shape = 'u8[65536]{0}', space=vmem, size = 0x10000, scoped, tag = 'output window, operand 0, single buffered']
    #allocation4 [shape = 's32[1]{0}', space=sflag, size = 0x4, scoped, tag = 'scoped memory for tpu_custom_call.1']
    %7 = vsyncpa [#allocation4], 0
    // Predicated region
    $region2: #{tpu_custom_call.1} parent=1 // pred_check
      _
    $region3: #{tpu_custom_call.1} parent=1 // pred_check_branch
      %9 = sbr.rel (0) target = $region5
    $region4: #{tpu_custom_call.1} parent=1 // pred_region
      _
    $region5: #{tpu_custom_call.1} parent=1 // pred_fallthru
      _
    // Predicated region
    $region6: #{tpu_custom_call.1} parent=1 // pred_check
      _
    $region7: #{tpu_custom_call.1} parent=1 // pred_check_branch
      %11 = sbr.rel (0) target = $region9
    $region8: #{tpu_custom_call.1} parent=1 // pred_region
      _
    $region9: #{tpu_custom_call.1} parent=1 // pred_fallthru
      _
    %p13 = scmp.eq.s32.totalorder 0, 0
    // Predicated region
    $region10: #{tpu_custom_call.1} parent=1 // pred_check
      %p14 = pneg %p13
    $region11: #{tpu_custom_call.1} parent=1 // pred_check_branch
      %16 = sbr.rel (%p14) target = $region13
    $region12: #{tpu_custom_call.1} parent=1 // pred_region
      %17 = vst [vmem:[#allocation2] sm:$0xff] 0.0
      %18 = vst [vmem:[#allocation2 + $0x8] sm:$0xff] 0.0
      %19 = vst [vmem:[#allocation2 + $0x10] sm:$0xff] 0.0
      %20 = vst [vmem:[#allocation2 + $0x18] sm:$0xff] 0.0
      %21 = vst [vmem:[#allocation2 + $0x20] sm:$0xff] 0.0
      %22 = vst [vmem:[#allocation2 + $0x28] sm:$0xff] 0.0
      %23 = vst [vmem:[#allocation2 + $0x30] sm:$0xff] 0.0
      %24 = vst [vmem:[#allocation2 + $0x38] sm:$0xff] 0.0
      %25 = vst [vmem:[#allocation2 + $0x40] sm:$0xff] 0.0
      %26 = vst [vmem:[#allocation2 + $0x48] sm:$0xff] 0.0
      %27 = vst [vmem:[#allocation2 + $0x50] sm:$0xff] 0.0
      %28 = vst [vmem:[#allocation2 + $0x58] sm:$0xff] 0.0
      %29 = vst [vmem:[#allocation2 + $0x60] sm:$0xff] 0.0
      %30 = vst [vmem:[#allocation2 + $0x68] sm:$0xff] 0.0
      %31 = vst [vmem:[#allocation2 + $0x70] sm:$0xff] 0.0
      %32 = vst [vmem:[#allocation2 + $0x78] sm:$0xff] 0.0
      %33 = vst [vmem:[#allocation2 + $0x80] sm:$0xff] 0.0
      %34 = vst [vmem:[#allocation2 + $0x88] sm:$0xff] 0.0
      %35 = vst [vmem:[#allocation2 + $0x90] sm:$0xff] 0.0
      %36 = vst [vmem:[#allocation2 + $0x98] sm:$0xff] 0.0
      %37 = vst [vmem:[#allocation2 + $0xa0] sm:$0xff] 0.0
      %38 = vst [vmem:[#allocation2 + $0xa8] sm:$0xff] 0.0
      %39 = vst [vmem:[#allocation2 + $0xb0] sm:$0xff] 0.0
      %40 = vst [vmem:[#allocation2 + $0xb8] sm:$0xff] 0.0
      %41 = vst [vmem:[#allocation2 + $0xc0] sm:$0xff] 0.0
      %42 = vst [vmem:[#allocation2 + $0xc8] sm:$0xff] 0.0
      %43 = vst [vmem:[#allocation2 + $0xd0] sm:$0xff] 0.0
      %44 = vst [vmem:[#allocation2 + $0xd8] sm:$0xff] 0.0
      %45 = vst [vmem:[#allocation2 + $0xe0] sm:$0xff] 0.0
      %46 = vst [vmem:[#allocation2 + $0xe8] sm:$0xff] 0.0
      %47 = vst [vmem:[#allocation2 + $0xf0] sm:$0xff] 0.0
      %48 = vst [vmem:[#allocation2 + $0xf8] sm:$0xff] 0.0
    $region13: #{tpu_custom_call.1} parent=1 // pred_fallthru
      _
    %v49 = vld [vmem:[#allocation2] sm:$0xff]
    %v50 = vld [vmem:[#allocation2 + $0x8] sm:$0xff]
    %v51 = vld [vmem:[#allocation2 + $0x10] sm:$0xff]
    %v52 = vld [vmem:[#allocation2 + $0x18] sm:$0xff]
    %v53 = vld [vmem:[#allocation2 + $0x20] sm:$0xff]
    %v54 = vld [vmem:[#allocation2 + $0x28] sm:$0xff]
    %v55 = vld [vmem:[#allocation2 + $0x30] sm:$0xff]
    %v56 = vld [vmem:[#allocation2 + $0x38] sm:$0xff]
    %v57 = vld [vmem:[#allocation2 + $0x40] sm:$0xff]
    %v58 = vld [vmem:[#allocation2 + $0x48] sm:$0xff]
    %v59 = vld [vmem:[#allocation2 + $0x50] sm:$0xff]
    %v60 = vld [vmem:[#allocation2 + $0x58] sm:$0xff]
    %v61 = vld [vmem:[#allocation2 + $0x60] sm:$0xff]
    %v62 = vld [vmem:[#allocation2 + $0x68] sm:$0xff]
    %v63 = vld [vmem:[#allocation2 + $0x70] sm:$0xff]
    %v64 = vld [vmem:[#allocation2 + $0x78] sm:$0xff]
    %v65 = vld [vmem:[#allocation2 + $0x80] sm:$0xff]
    %v66 = vld [vmem:[#allocation2 + $0x88] sm:$0xff]
    %v67 = vld [vmem:[#allocation2 + $0x90] sm:$0xff]
    %v68 = vld [vmem:[#allocation2 + $0x98] sm:$0xff]
    %v69 = vld [vmem:[#allocation2 + $0xa0] sm:$0xff]
    %v70 = vld [vmem:[#allocation2 + $0xa8] sm:$0xff]
    %v71 = vld [vmem:[#allocation2 + $0xb0] sm:$0xff]
    %v72 = vld [vmem:[#allocation2 + $0xb8] sm:$0xff]
    %v73 = vld [vmem:[#allocation2 + $0xc0] sm:$0xff]
    %v74 = vld [vmem:[#allocation2 + $0xc8] sm:$0xff]
    %v75 = vld [vmem:[#allocation2 + $0xd0] sm:$0xff]
    %v76 = vld [vmem:[#allocation2 + $0xd8] sm:$0xff]
    %v77 = vld [vmem:[#allocation2 + $0xe0] sm:$0xff]
    %v78 = vld [vmem:[#allocation2 + $0xe8] sm:$0xff]
    %v79 = vld [vmem:[#allocation2 + $0xf0] sm:$0xff]
    %v80 = vld [vmem:[#allocation2 + $0xf8] sm:$0xff]
    %v81 = vld [vmem:[%s0] sm:$0xf]
    %v82 = vld [vmem:[%s0 + $0x4] sm:$0xf]
    %v83 = vld [vmem:[%s0 + $0x8] sm:$0xf]
    %v84 = vld [vmem:[%s0 + $0xc] sm:$0xf]
    %v85 = vld [vmem:[%s0 + $0x10] sm:$0xf]
    %v86 = vld [vmem:[%s0 + $0x14] sm:$0xf]
    %v87 = vld [vmem:[%s0 + $0x18] sm:$0xf]
    %v88 = vld [vmem:[%s0 + $0x1c] sm:$0xf]
    %v89 = vld [vmem:[%s0 + $0x20] sm:$0xf]
    %v90 = vld [vmem:[%s0 + $0x24] sm:$0xf]
    %v91 = vld [vmem:[%s0 + $0x28] sm:$0xf]
    %v92 = vld [vmem:[%s0 + $0x2c] sm:$0xf]
    %v93 = vld [vmem:[%s0 + $0x30] sm:$0xf]
    %v94 = vld [vmem:[%s0 + $0x34] sm:$0xf]
    %v95 = vld [vmem:[%s0 + $0x38] sm:$0xf]
    %v96 = vld [vmem:[%s0 + $0x3c] sm:$0xf]
    %v97 = vld [vmem:[%s1] sm:$0xff]
    %v98 = vld [vmem:[%s1 + $0x8] sm:$0xff]
    %v99 = vld [vmem:[%s1 + $0x10] sm:$0xff]
    %v100 = vld [vmem:[%s1 + $0x18] sm:$0xff]
    %v117 = vunpack.c.l.b16 %v81
    %v118 = vunpack.c.l.b16 %v82
    %v119 = vunpack.c.l.b16 %v83
    %v120 = vunpack.c.l.b16 %v84
    %v121 = vunpack.c.l.b16 %v85
    %v122 = vunpack.c.l.b16 %v86
    %v123 = vunpack.c.l.b16 %v87
    %v124 = vunpack.c.l.b16 %v88
    %v125 = vunpack.c.l.b16 %v89
    %v126 = vunpack.c.l.b16 %v90
    %v127 = vunpack.c.l.b16 %v91
    %v128 = vunpack.c.l.b16 %v92
    %v129 = vunpack.c.l.b16 %v93
    %v130 = vunpack.c.l.b16 %v94
    %v131 = vunpack.c.l.b16 %v95
    %v132 = vunpack.c.l.b16 %v96
    %v133 = vpack.c.b16 %v118, %v117
    %v134 = vpack.c.b16 %v120, %v119
    %v135 = vpack.c.b16 %v122, %v121
    %v136 = vpack.c.b16 %v124, %v123
    %v137 = vpack.c.b16 %v126, %v125
    %v138 = vpack.c.b16 %v128, %v127
    %v139 = vpack.c.b16 %v130, %v129
    %v140 = vpack.c.b16 %v132, %v131
    %v145 = vunpack.c.l.b16 %v97
    %v146 = vunpack.c.h.b16 %v97
    %v147 = vunpack.c.l.b16 %v98
    %v148 = vunpack.c.h.b16 %v98
    %v149 = vunpack.c.l.b16 %v99
    %v150 = vunpack.c.h.b16 %v99
    %v151 = vunpack.c.l.b16 %v100
    %v152 = vunpack.c.h.b16 %v100
    %v153 = vpack.c.b16 %v147, %v145
    %v154 = vpack.c.b16 %v148, %v146
    %v155 = vpack.c.b16 %v151, %v149
    %v156 = vpack.c.b16 %v152, %v150
    %vm161 = vcmask 261120
    %v163 = vsel %vm161, %v133, 0
    %v166 = vsel %vm161, %v134, 0
    %v169 = vsel %vm161, %v135, 0
    %v172 = vsel %vm161, %v136, 0
    %v175 = vsel %vm161, %v137, 0
    %v178 = vsel %vm161, %v138, 0
    %v181 = vsel %vm161, %v139, 0
    %v184 = vsel %vm161, %v140, 0
    %186 = vmatprep.subr.bf16.mxu0 0
    %187 = vmatpush1.bf16.msra.mxu0 0
    %188 = vmatprep.subr.bf16.mxu0 0
    %189 = vmatpush1.bf16.msra.mxu0 0
    %190 = vmatprep.subr.bf16.mxu0 0
    %191 = vmatpush1.bf16.msra.mxu0 0
    %192 = vmatprep.subr.bf16.mxu0 0
    %193 = vmatpush1.bf16.msra.mxu0 0
    %194 = vmatprep.subr.bf16.mxu0 0
    %195 = vmatpush1.bf16.msra.mxu0 0
    %196 = vmatprep.subr.bf16.mxu0 0
    %197 = vmatpush1.bf16.msra.mxu0 0
    %198 = vmatprep.subr.bf16.mxu0 %v156
    %199 = vmatpush1.bf16.msra.mxu0 %v155
    %200 = vmatprep.subr.bf16.mxu0 %v154
    %201 = vmatpush1.bf16.msra.mxu0 %v153
    %202 = vmatprep.subr.bf16.mxu0 0
    %203 = vmatpush2.bf16.msra.mxu0 0
    %204 = vmatprep.subr.bf16.mxu0 0
    %205 = vmatpush2.bf16.msra.mxu0 0
    %206 = vmatprep.subr.bf16.mxu0 0
    %207 = vmatpush2.bf16.msra.mxu0 0
    %208 = vmatprep.subr.bf16.mxu0 0
    %209 = vmatpush2.bf16.msra.mxu0 0
    %210 = vmatprep.subr.bf16.mxu0 0
    %211 = vmatpush2.bf16.msra.mxu0 0
    %212 = vmatprep.subr.bf16.mxu0 0
    %213 = vmatpush2.bf16.msra.mxu0 0
    %214 = vmatprep.subr.bf16.mxu0 0
    %215 = vmatpush2.bf16.msra.mxu0 0
    %216 = vmatprep.subr.bf16.mxu0 0
    %217 = vmatpush2.bf16.msra.mxu0 0
    %218 = vmatprep.mubr.bf16.mxu0 0
    %219 = vmatmul.mubr.bf16.gmra.mxu0 %v163
    %v220 = vpop.f32.mrf.mxu0
    %v221 = vadd.f32 0.0, %v220
    %v222 = vpop.f32.mrf.mxu0
    %v223 = vadd.f32 0.0, %v222
    %v224 = vpop.f32.mrf.mxu0
    %v225 = vadd.f32 0.0, %v224
    %v226 = vpop.f32.mrf.mxu0
    %v227 = vadd.f32 0.0, %v226
    %228 = vmatprep.mubr.bf16.mxu0 0
    %229 = vmatmul.mubr.bf16.gmra.mxu0 %v166
    %v230 = vpop.f32.mrf.mxu0
    %v231 = vadd.f32 0.0, %v230
    %v232 = vpop.f32.mrf.mxu0
    %v233 = vadd.f32 0.0, %v232
    %v234 = vpop.f32.mrf.mxu0
    %v235 = vadd.f32 0.0, %v234
    %v236 = vpop.f32.mrf.mxu0
    %v237 = vadd.f32 0.0, %v236
    %238 = vmatprep.mubr.bf16.mxu0 0
    %239 = vmatmul.mubr.bf16.gmra.mxu0 %v169
    %v240 = vpop.f32.mrf.mxu0
    %v241 = vadd.f32 0.0, %v240
    %v242 = vpop.f32.mrf.mxu0
    %v243 = vadd.f32 0.0, %v242
    %v244 = vpop.f32.mrf.mxu0
    %v245 = vadd.f32 0.0, %v244
    %v246 = vpop.f32.mrf.mxu0
    %v247 = vadd.f32 0.0, %v246
    %248 = vmatprep.mubr.bf16.mxu0 0
    %249 = vmatmul.mubr.bf16.gmra.mxu0 %v172
    %v250 = vpop.f32.mrf.mxu0
    %v251 = vadd.f32 0.0, %v250
    %v252 = vpop.f32.mrf.mxu0
    %v253 = vadd.f32 0.0, %v252
    %v254 = vpop.f32.mrf.mxu0
    %v255 = vadd.f32 0.0, %v254
    %v256 = vpop.f32.mrf.mxu0
    %v257 = vadd.f32 0.0, %v256
    %258 = vmatprep.mubr.bf16.mxu0 0
    %259 = vmatmul.mubr.bf16.gmra.mxu0 %v175
    %v260 = vpop.f32.mrf.mxu0
    %v261 = vadd.f32 0.0, %v260
    %v262 = vpop.f32.mrf.mxu0
    %v263 = vadd.f32 0.0, %v262
    %v264 = vpop.f32.mrf.mxu0
    %v265 = vadd.f32 0.0, %v264
    %v266 = vpop.f32.mrf.mxu0
    %v267 = vadd.f32 0.0, %v266
    %268 = vmatprep.mubr.bf16.mxu0 0
    %269 = vmatmul.mubr.bf16.gmra.mxu0 %v178
    %v270 = vpop.f32.mrf.mxu0
    %v271 = vadd.f32 0.0, %v270
    %v272 = vpop.f32.mrf.mxu0
    %v273 = vadd.f32 0.0, %v272
    %v274 = vpop.f32.mrf.mxu0
    %v275 = vadd.f32 0.0, %v274
    %v276 = vpop.f32.mrf.mxu0
    %v277 = vadd.f32 0.0, %v276
    %278 = vmatprep.mubr.bf16.mxu0 0
    %279 = vmatmul.mubr.bf16.gmra.mxu0 %v181
    %v280 = vpop.f32.mrf.mxu0
    %v281 = vadd.f32 0.0, %v280
    %v282 = vpop.f32.mrf.mxu0
    %v283 = vadd.f32 0.0, %v282
    %v284 = vpop.f32.mrf.mxu0
    %v285 = vadd.f32 0.0, %v284
    %v286 = vpop.f32.mrf.mxu0
    %v287 = vadd.f32 0.0, %v286
    %288 = vmatprep.mubr.bf16.mxu0 0
    %289 = vmatmul.mubr.bf16.gmra.mxu0 %v184
    %v290 = vpop.f32.mrf.mxu0
    %v291 = vadd.f32 0.0, %v290
    %v292 = vpop.f32.mrf.mxu0
    %v293 = vadd.f32 0.0, %v292
    %v294 = vpop.f32.mrf.mxu0
    %v295 = vadd.f32 0.0, %v294
    %v296 = vpop.f32.mrf.mxu0
    %v297 = vadd.f32 0.0, %v296
    %298 = vdwg.mxu0
    %v299 = vadd.f32 %v49, %v221
    %v300 = vadd.f32 %v50, %v223
    %v301 = vadd.f32 %v51, %v225
    %v302 = vadd.f32 %v52, %v227
    %v303 = vadd.f32 %v53, %v231
    %v304 = vadd.f32 %v54, %v233
    %v305 = vadd.f32 %v55, %v235
    %v306 = vadd.f32 %v56, %v237
    %v307 = vadd.f32 %v57, %v241
    %v308 = vadd.f32 %v58, %v243
    %v309 = vadd.f32 %v59, %v245
    %v310 = vadd.f32 %v60, %v247
    %v311 = vadd.f32 %v61, %v251
    %v312 = vadd.f32 %v62, %v253
    %v313 = vadd.f32 %v63, %v255
    %v314 = vadd.f32 %v64, %v257
    %v315 = vadd.f32 %v65, %v261
    %v316 = vadd.f32 %v66, %v263
    %v317 = vadd.f32 %v67, %v265
    %v318 = vadd.f32 %v68, %v267
    %v319 = vadd.f32 %v69, %v271
    %v320 = vadd.f32 %v70, %v273
    %v321 = vadd.f32 %v71, %v275
    %v322 = vadd.f32 %v72, %v277
    %v323 = vadd.f32 %v73, %v281
    %v324 = vadd.f32 %v74, %v283
    %v325 = vadd.f32 %v75, %v285
    %v326 = vadd.f32 %v76, %v287
    %v327 = vadd.f32 %v77, %v291
    %v328 = vadd.f32 %v78, %v293
    %v329 = vadd.f32 %v79, %v295
    %v330 = vadd.f32 %v80, %v297
    %331 = vst [vmem:[#allocation2] sm:$0xff] %v299
    %332 = vst [vmem:[#allocation2 + $0x8] sm:$0xff] %v300
    %333 = vst [vmem:[#allocation2 + $0x10] sm:$0xff] %v301
    %334 = vst [vmem:[#allocation2 + $0x18] sm:$0xff] %v302
    %335 = vst [vmem:[#allocation2 + $0x20] sm:$0xff] %v303
    %336 = vst [vmem:[#allocation2 + $0x28] sm:$0xff] %v304
    %337 = vst [vmem:[#allocation2 + $0x30] sm:$0xff] %v305
    %338 = vst [vmem:[#allocation2 + $0x38] sm:$0xff] %v306
    %339 = vst [vmem:[#allocation2 + $0x40] sm:$0xff] %v307
    %340 = vst [vmem:[#allocation2 + $0x48] sm:$0xff] %v308
    %341 = vst [vmem:[#allocation2 + $0x50] sm:$0xff] %v309
    %342 = vst [vmem:[#allocation2 + $0x58] sm:$0xff] %v310
    %343 = vst [vmem:[#allocation2 + $0x60] sm:$0xff] %v311
    %344 = vst [vmem:[#allocation2 + $0x68] sm:$0xff] %v312
    %345 = vst [vmem:[#allocation2 + $0x70] sm:$0xff] %v313
    %346 = vst [vmem:[#allocation2 + $0x78] sm:$0xff] %v314
    %347 = vst [vmem:[#allocation2 + $0x80] sm:$0xff] %v315
    %348 = vst [vmem:[#allocation2 + $0x88] sm:$0xff] %v316
    %349 = vst [vmem:[#allocation2 + $0x90] sm:$0xff] %v317
    %350 = vst [vmem:[#allocation2 + $0x98] sm:$0xff] %v318
    %351 = vst [vmem:[#allocation2 + $0xa0] sm:$0xff] %v319
    %352 = vst [vmem:[#allocation2 + $0xa8] sm:$0xff] %v320
    %353 = vst [vmem:[#allocation2 + $0xb0] sm:$0xff] %v321
    %354 = vst [vmem:[#allocation2 + $0xb8] sm:$0xff] %v322
    %355 = vst [vmem:[#allocation2 + $0xc0] sm:$0xff] %v323
    %356 = vst [vmem:[#allocation2 + $0xc8] sm:$0xff] %v324
    %357 = vst [vmem:[#allocation2 + $0xd0] sm:$0xff] %v325
    %358 = vst [vmem:[#allocation2 + $0xd8] sm:$0xff] %v326
    %359 = vst [vmem:[#allocation2 + $0xe0] sm:$0xff] %v327
    %360 = vst [vmem:[#allocation2 + $0xe8] sm:$0xff] %v328
    %361 = vst [vmem:[#allocation2 + $0xf0] sm:$0xff] %v329
    %362 = vst [vmem:[#allocation2 + $0xf8] sm:$0xff] %v330
    // Predicated region
    $region14: #{tpu_custom_call.1} parent=1 // pred_check
      %p363 = pneg %p13
    $region15: #{tpu_custom_call.1} parent=1 // pred_check_branch
      %365 = sbr.rel (%p363) target = $region17
    $region16: #{tpu_custom_call.1} parent=1 // pred_region
      %v366 = vld [vmem:[#allocation2] sm:$0xff]
      %v367 = vld [vmem:[#allocation2 + $0x8] sm:$0xff]
      %v368 = vld [vmem:[#allocation2 + $0x10] sm:$0xff]
      %v369 = vld [vmem:[#allocation2 + $0x18] sm:$0xff]
      %v370 = vld [vmem:[#allocation2 + $0x20] sm:$0xff]
      %v371 = vld [vmem:[#allocation2 + $0x28] sm:$0xff]
      %v372 = vld [vmem:[#allocation2 + $0x30] sm:$0xff]
      %v373 = vld [vmem:[#allocation2 + $0x38] sm:$0xff]
      %v374 = vld [vmem:[#allocation2 + $0x40] sm:$0xff]
      %v375 = vld [vmem:[#allocation2 + $0x48] sm:$0xff]
      %v376 = vld [vmem:[#allocation2 + $0x50] sm:$0xff]
      %v377 = vld [vmem:[#allocation2 + $0x58] sm:$0xff]
      %v378 = vld [vmem:[#allocation2 + $0x60] sm:$0xff]
      %v379 = vld [vmem:[#allocation2 + $0x68] sm:$0xff]
      %v380 = vld [vmem:[#allocation2 + $0x70] sm:$0xff]
      %v381 = vld [vmem:[#allocation2 + $0x78] sm:$0xff]
      %v382 = vld [vmem:[#allocation2 + $0x80] sm:$0xff]
      %v383 = vld [vmem:[#allocation2 + $0x88] sm:$0xff]
      %v384 = vld [vmem:[#allocation2 + $0x90] sm:$0xff]
      %v385 = vld [vmem:[#allocation2 + $0x98] sm:$0xff]
      %v386 = vld [vmem:[#allocation2 + $0xa0] sm:$0xff]
      %v387 = vld [vmem:[#allocation2 + $0xa8] sm:$0xff]
      %v388 = vld [vmem:[#allocation2 + $0xb0] sm:$0xff]
      %v389 = vld [vmem:[#allocation2 + $0xb8] sm:$0xff]
      %v390 = vld [vmem:[#allocation2 + $0xc0] sm:$0xff]
      %v391 = vld [vmem:[#allocation2 + $0xc8] sm:$0xff]
      %v392 = vld [vmem:[#allocation2 + $0xd0] sm:$0xff]
      %v393 = vld [vmem:[#allocation2 + $0xd8] sm:$0xff]
      %v394 = vld [vmem:[#allocation2 + $0xe0] sm:$0xff]
      %v395 = vld [vmem:[#allocation2 + $0xe8] sm:$0xff]
      %v396 = vld [vmem:[#allocation2 + $0xf0] sm:$0xff]
      %v397 = vld [vmem:[#allocation2 + $0xf8] sm:$0xff]
      %v398 = vmul.f32 %v366, 0.999995
      %v399 = vmul.f32 %v367, 0.999995
      %v400 = vmul.f32 %v368, 0.999995
      %v401 = vmul.f32 %v369, 0.999995
      %v402 = vmul.f32 %v370, 0.999995
      %v403 = vmul.f32 %v371, 0.999995
      %v404 = vmul.f32 %v372, 0.999995
      %v405 = vmul.f32 %v373, 0.999995
      %v406 = vmul.f32 %v374, 0.999995
      %v407 = vmul.f32 %v375, 0.999995
      %v408 = vmul.f32 %v376, 0.999995
      %v409 = vmul.f32 %v377, 0.999995
      %v410 = vmul.f32 %v378, 0.999995
      %v411 = vmul.f32 %v379, 0.999995
      %v412 = vmul.f32 %v380, 0.999995
      %v413 = vmul.f32 %v381, 0.999995
      %v414 = vmul.f32 %v382, 0.999995
      %v415 = vmul.f32 %v383, 0.999995
      %v416 = vmul.f32 %v384, 0.999995
      %v417 = vmul.f32 %v385, 0.999995
      %v418 = vmul.f32 %v386, 0.999995
      %v419 = vmul.f32 %v387, 0.999995
      %v420 = vmul.f32 %v388, 0.999995
      %v421 = vmul.f32 %v389, 0.999995
      %v422 = vmul.f32 %v390, 0.999995
      %v423 = vmul.f32 %v391, 0.999995
      %v424 = vmul.f32 %v392, 0.999995
      %v425 = vmul.f32 %v393, 0.999995
      %v426 = vmul.f32 %v394, 0.999995
      %v427 = vmul.f32 %v395, 0.999995
      %v428 = vmul.f32 %v396, 0.999995
      %v429 = vmul.f32 %v397, 0.999995
      %v430 = vmax.f32 %v398, 0.0
      %v431 = vmax.f32 %v399, 0.0
      %v432 = vmax.f32 %v400, 0.0
      %v433 = vmax.f32 %v401, 0.0
      %v434 = vmax.f32 %v402, 0.0
      %v435 = vmax.f32 %v403, 0.0
      %v436 = vmax.f32 %v404, 0.0
      %v437 = vmax.f32 %v405, 0.0
      %v438 = vmax.f32 %v406, 0.0
      %v439 = vmax.f32 %v407, 0.0
      %v440 = vmax.f32 %v408, 0.0
      %v441 = vmax.f32 %v409, 0.0
      %v442 = vmax.f32 %v410, 0.0
      %v443 = vmax.f32 %v411, 0.0
      %v444 = vmax.f32 %v412, 0.0
      %v445 = vmax.f32 %v413, 0.0
      %v446 = vmax.f32 %v414, 0.0
      %v447 = vmax.f32 %v415, 0.0
      %v448 = vmax.f32 %v416, 0.0
      %v449 = vmax.f32 %v417, 0.0
      %v450 = vmax.f32 %v418, 0.0
      %v451 = vmax.f32 %v419, 0.0
      %v452 = vmax.f32 %v420, 0.0
      %v453 = vmax.f32 %v421, 0.0
      %v454 = vmax.f32 %v422, 0.0
      %v455 = vmax.f32 %v423, 0.0
      %v456 = vmax.f32 %v424, 0.0
      %v457 = vmax.f32 %v425, 0.0
      %v458 = vmax.f32 %v426, 0.0
      %v459 = vmax.f32 %v427, 0.0
      %v460 = vmax.f32 %v428, 0.0
      %v461 = vmax.f32 %v429, 0.0
      %v462 = vpack.c.bf16 %v432, %v430
      %v463 = vpack.c.bf16 %v433, %v431
      %v464 = vpack.c.bf16 %v436, %v434
      %v465 = vpack.c.bf16 %v437, %v435
      %v466 = vpack.c.bf16 %v440, %v438
      %v467 = vpack.c.bf16 %v441, %v439
      %v468 = vpack.c.bf16 %v444, %v442
      %v469 = vpack.c.bf16 %v445, %v443
      %v470 = vpack.c.bf16 %v448, %v446
      %v471 = vpack.c.bf16 %v449, %v447
      %v472 = vpack.c.bf16 %v452, %v450
      %v473 = vpack.c.bf16 %v453, %v451
      %v474 = vpack.c.bf16 %v456, %v454
      %v475 = vpack.c.bf16 %v457, %v455
      %v476 = vpack.c.bf16 %v460, %v458
      %v477 = vpack.c.bf16 %v461, %v459
      %v494 = vunpack.c.l.b16 %v462
      %v495 = vunpack.c.l.b16 %v463
      %v496 = vunpack.c.h.b16 %v462
      %v497 = vunpack.c.h.b16 %v463
      %v498 = vunpack.c.l.b16 %v464
      %v499 = vunpack.c.l.b16 %v465
      %v500 = vunpack.c.h.b16 %v464
      %v501 = vunpack.c.h.b16 %v465
      %v502 = vunpack.c.l.b16 %v466
      %v503 = vunpack.c.l.b16 %v467
      %v504 = vunpack.c.h.b16 %v466
      %v505 = vunpack.c.h.b16 %v467
      %v506 = vunpack.c.l.b16 %v468
      %v507 = vunpack.c.l.b16 %v469
      %v508 = vunpack.c.h.b16 %v468
      %v509 = vunpack.c.h.b16 %v469
      %v510 = vunpack.c.l.b16 %v470
      %v511 = vunpack.c.l.b16 %v471
      %v512 = vunpack.c.h.b16 %v470
      %v513 = vunpack.c.h.b16 %v471
      %v514 = vunpack.c.l.b16 %v472
      %v515 = vunpack.c.l.b16 %v473
      %v516 = vunpack.c.h.b16 %v472
      %v517 = vunpack.c.h.b16 %v473
      %v518 = vunpack.c.l.b16 %v474
      %v519 = vunpack.c.l.b16 %v475
      %v520 = vunpack.c.h.b16 %v474
      %v521 = vunpack.c.h.b16 %v475
      %v522 = vunpack.c.l.b16 %v476
      %v523 = vunpack.c.l.b16 %v477
      %v524 = vunpack.c.h.b16 %v476
      %v525 = vunpack.c.h.b16 %v477
      %v526 = vpack.c.b16 %v495, %v494
      %v527 = vpack.c.b16 %v497, %v496
      %v528 = vpack.c.b16 %v499, %v498
      %v529 = vpack.c.b16 %v501, %v500
      %v530 = vpack.c.b16 %v503, %v502
      %v531 = vpack.c.b16 %v505, %v504
      %v532 = vpack.c.b16 %v507, %v506
      %v533 = vpack.c.b16 %v509, %v508
      %v534 = vpack.c.b16 %v511, %v510
      %v535 = vpack.c.b16 %v513, %v512
      %v536 = vpack.c.b16 %v515, %v514
      %v537 = vpack.c.b16 %v517, %v516
      %v538 = vpack.c.b16 %v519, %v518
      %v539 = vpack.c.b16 %v521, %v520
      %v540 = vpack.c.b16 %v523, %v522
      %v541 = vpack.c.b16 %v525, %v524
      %558 = vst [vmem:[#allocation3] sm:$0xff] %v526
      %559 = vst [vmem:[#allocation3 + $0x8] sm:$0xff] %v527
      %560 = vst [vmem:[#allocation3 + $0x10] sm:$0xff] %v528
      %561 = vst [vmem:[#allocation3 + $0x18] sm:$0xff] %v529
      %562 = vst [vmem:[#allocation3 + $0x20] sm:$0xff] %v530
      %563 = vst [vmem:[#allocation3 + $0x28] sm:$0xff] %v531
      %564 = vst [vmem:[#allocation3 + $0x30] sm:$0xff] %v532
      %565 = vst [vmem:[#allocation3 + $0x38] sm:$0xff] %v533
      %566 = vst [vmem:[#allocation3 + $0x40] sm:$0xff] %v534
      %567 = vst [vmem:[#allocation3 + $0x48] sm:$0xff] %v535
      %568 = vst [vmem:[#allocation3 + $0x50] sm:$0xff] %v536
      %569 = vst [vmem:[#allocation3 + $0x58] sm:$0xff] %v537
      %570 = vst [vmem:[#allocation3 + $0x60] sm:$0xff] %v538
      %571 = vst [vmem:[#allocation3 + $0x68] sm:$0xff] %v539
      %572 = vst [vmem:[#allocation3 + $0x70] sm:$0xff] %v540
      %573 = vst [vmem:[#allocation3 + $0x78] sm:$0xff] %v541
    $region17: #{tpu_custom_call.1} parent=1 // pred_fallthru
      _
    // Predicated region
    $region18: #{tpu_custom_call.1} parent=1 // pred_check
      _
    $region19: #{tpu_custom_call.1} parent=1 // pred_check_branch
      %575 = sbr.rel (0) target = $region21
    $region20: #{tpu_custom_call.1} parent=1 // pred_region
      %s577 = ssub.s32 2048, 2048
      %578 = vsyncadd [#allocation4], %s577
      %s579 = sshll.u32 [#allocation3], 4
      %s580 = int_to_ptr.vmem [resolvable:$true] %s579
      %585 = dma.vmem_to_hbm [thread:$0]  %s580, 2048, %s2, [#allocation4], 128, 128, 8
    $region21: #{tpu_custom_call.1} parent=1 // pred_fallthru
      _
    // Predicated region
    $region22: #{tpu_custom_call.1} parent=1 // pred_check
      _
    $region23: #{tpu_custom_call.1} parent=1 // pred_check_branch
      %587 = sbr.rel (0) target = $region25
    $region24: #{tpu_custom_call.1} parent=1 // pred_region
      %588 = dma.done [#allocation4], 2048
    $region25: #{tpu_custom_call.1} parent=1 // pred_fallthru
      _
    %589 = vsyncpa [#allocation4], 1

</llo_original>
